<compile_context>
chip_gen: v7x
topology: tpu7x:2x2x1
jax: 0.10.0
libtpu: 0.0.40
codegen_flags: <defaults>
</compile_context>

<pallas_src>
import functools

import jax
import jax.numpy as jnp
import numpy as np
from jax.experimental import pallas as pl
from jax.experimental.pallas import tpu as pltpu

K_MAX = 11
PAD_MAX = (K_MAX - 1) // 2  # 5
BN_EPS = 1e-5
LEAKY_SLOPE = 0.01  # PyTorch nn.LeakyReLU default
LANE = 128


def _round_up(a, b):
    return (a + b - 1) // b * b


def _cdiv(a, b):
    return (a + b - 1) // b


def _conv_tile(x_main, x_halo, w, lt):
    """One lane-dense conv tile: (C_out, K*C_in) @ (K*C_in, LT) on the MXU.

    x_main: (C_in, LT)   padded-input window starting at this tile's first output col
    x_halo: (C_in, 128)  the next 128 input columns (covers the k<=10 halo)
    w:      (C_out, K*C_in) flattened combined weight (tap-major)
    """
    lt_ext = lt + LANE
    xwin = jnp.concatenate([x_main, x_halo], axis=-1)          # (C_in, LT+128)
    taps = [x_main]                                             # k = 0 tap
    for k in range(1, K_MAX):
        # column i of the rolled window holds xwin[:, i + k]; slice is lane-aligned
        taps.append(pltpu.roll(xwin, shift=lt_ext - k, axis=1)[:, :lt])
    xstack = jnp.concatenate(taps, axis=0)                      # (K*C_in, LT)
    return jnp.dot(w, xstack, preferred_element_type=jnp.float32)  # (C_out, LT) f32


def _partial_sums(y, c_out, lt):
    """Lane-resident (2*C_out, 128) partial sum / sum-of-squares of a (C_out, LT) tile."""
    s = jnp.zeros((c_out, LANE), jnp.float32)
    ss = jnp.zeros((c_out, LANE), jnp.float32)
    for g in range(lt // LANE):
        chunk = y[:, g * LANE:(g + 1) * LANE]
        s = s + chunk
        ss = ss + chunk * chunk
    return jnp.concatenate([s, ss], axis=0)                     # (2*C_out, 128)


def _stats_kernel(xa_ref, xh_ref, w_ref, stats_ref, *, lt, l_valid, nts):
    """Pass 1 (stats only): conv tile + per-(batch, split) BN sum / sumsq accumulation.

    xa_ref:    (1, C_in, LT)   main input tile of the padded input
    xh_ref:    (1, C_in, 128)  128-lane halo block (next columns)
    w_ref:     (C_out, K*C_in) flattened combined conv weight
    stats_ref: (1, 1, 2*C_out, 128) resident accumulator (sum rows, then sumsq rows)
    """
    s_idx = pl.program_id(1)
    j = pl.program_id(2)
    c_out = w_ref.shape[0]

    t = s_idx * nts + j          # global L-tile index
    offset = t * lt              # first output column of this tile

    y = _conv_tile(xa_ref[0], xh_ref[0], w_ref[...], lt)       # (C_out, LT) f32

    @pl.when(j == 0)
    def _():
        stats_ref[0, 0] = jnp.zeros((2 * c_out, LANE), jnp.float32)

    fully_valid = offset + lt <= l_valid

    @pl.when(fully_valid)
    def _():
        stats_ref[0, 0] = stats_ref[0, 0] + _partial_sums(y, c_out, lt)

    @pl.when(jnp.logical_not(fully_valid))
    def _():
        # Boundary (or fully padded) tile: mask out columns beyond the true length L.
        pos = jax.lax.broadcasted_iota(jnp.int32, (c_out, lt), 1) + offset
        ym = jnp.where(pos < l_valid, y, 0.0)
        stats_ref[0, 0] = stats_ref[0, 0] + _partial_sums(ym, c_out, lt)


def _conv_bn_lrelu_kernel(xa_ref, xh_ref, w_ref, scale_ref, shift_ref, out_ref, *, lt):
    """Pass 2: recompute conv tile, apply fused BN scale/shift + LeakyReLU."""
    y = _conv_tile(xa_ref[0], xh_ref[0], w_ref[...], lt)
    z = y * scale_ref[...] + shift_ref[...]
    out_ref[0] = jnp.where(z >= 0.0, z, LEAKY_SLOPE * z)


def spectral_conv_block(x, w3, b3, w7, b7, w11, b11, gamma, beta, *, max_lt=4096):
    """x: (B, C_in, L) float32. Returns (B, C_out, L) float32 (training-mode BN)."""
    B, C_in, L = x.shape
    C3 = w3.shape[0]
    C_out = 3 * C3

    # Fold the three "same" convs into one k=11 conv stacked along C_out, then flatten
    # to (C_out, K*C_in), tap-major, so every tile is a single MXU matmul.
    w_comb = jnp.zeros((C_out, C_in, K_MAX), jnp.float32)
    w_comb = w_comb.at[0:C3, :, 4:7].set(w3)          # k=3,  centered
    w_comb = w_comb.at[C3:2 * C3, :, 2:9].set(w7)     # k=7,  centered
    w_comb = w_comb.at[2 * C3:, :, :].set(w11)        # k=11
    w_flat = jnp.transpose(w_comb, (0, 2, 1)).reshape(C_out, K_MAX * C_in)
    # Conv bias is exactly cancelled by training-mode BN mean subtraction -> dropped.
    del b3, b7, b11

    # Lane-dense L tiling; big tiles amortize per-grid-step overhead. Even at LT=4096
    # total VMEM use is ~2-3 MB (fits v5e/v6e 128 MiB and v7x 64 MiB with huge margin).
    LT = min(max_lt, _round_up(L, LANE))
    NT = _cdiv(L, LT)                    # tiles that carry real data
    NSPLIT = 2 if NT >= 2 else 1         # split the reduction so both v7x cores work
    NTS = _cdiv(NT, NSPLIT)
    NT_pad = NSPLIT * NTS

    # Left halo pad (5 zeros) + right pad so every tile's 128-lane halo block exists.
    Lp = NT_pad * LT + LANE
    xp = jnp.pad(x.astype(jnp.float32),
                 ((0, 0), (0, 0), (PAD_MAX, Lp - L - PAD_MAX)))

    # --- Pass 1: BN statistics only (conv intermediate never touches HBM) -----------
    kernel1 = functools.partial(_stats_kernel, lt=LT, l_valid=L, nts=NTS)
    stats = pl.pallas_call(
        kernel1,
        grid=(B, NSPLIT, NTS),
        in_specs=[
            pl.BlockSpec((1, C_in, LT), lambda b, s, j: (b, 0, s * NTS + j)),
            pl.BlockSpec((1, C_in, LANE),
                         lambda b, s, j: (b, 0, (s * NTS + j + 1) * (LT // LANE))),
            pl.BlockSpec((C_out, K_MAX * C_in), lambda b, s, j: (0, 0)),
        ],
        out_specs=pl.BlockSpec((1, 1, 2 * C_out, LANE), lambda b, s, j: (b, s, 0, 0)),
        out_shape=jax.ShapeDtypeStruct((B, NSPLIT, 2 * C_out, LANE), jnp.float32),
        compiler_params=pltpu.CompilerParams(
            dimension_semantics=("parallel", "parallel", "arbitrary"),
            vmem_limit_bytes=32 * 1024 * 1024),
    )(xp, xp, w_flat)

    # --- Finalize BN statistics (tiny O(C_out) plain-JAX glue) ----------------------
    n = float(B * L)
    sums = jnp.sum(stats, axis=(0, 1, 3))            # (2*C_out,)
    mean = sums[:C_out] / n
    # TODO(synk): E[y^2]-E[y]^2 can lose precision when |mean| >> std; a shifted /
    # Welford-style accumulation would be more robust for large-DC-offset inputs.
    var = jnp.maximum(sums[C_out:] / n - mean * mean, 0.0)
    inv_std = jax.lax.rsqrt(var + BN_EPS)
    scale = (gamma * inv_std).astype(jnp.float32).reshape(C_out, 1)
    shift = (beta - mean * gamma * inv_std).astype(jnp.float32).reshape(C_out, 1)

    # --- Pass 2: recompute conv + fused BN affine + LeakyReLU, direct (B,C_out,L) ---
    kernel2 = functools.partial(_conv_bn_lrelu_kernel, lt=LT)
    out = pl.pallas_call(
        kernel2,
        grid=(B, NT),
        in_specs=[
            pl.BlockSpec((1, C_in, LT), lambda b, j: (b, 0, j)),
            pl.BlockSpec((1, C_in, LANE), lambda b, j: (b, 0, (j + 1) * (LT // LANE))),
            pl.BlockSpec((C_out, K_MAX * C_in), lambda b, j: (0, 0)),
            pl.BlockSpec((C_out, 1), lambda b, j: (0, 0)),
            pl.BlockSpec((C_out, 1), lambda b, j: (0, 0)),
        ],
        out_specs=pl.BlockSpec((1, C_out, LT), lambda b, j: (b, 0, j)),
        out_shape=jax.ShapeDtypeStruct((B, C_out, L), jnp.float32),
        compiler_params=pltpu.CompilerParams(
            dimension_semantics=("parallel", "parallel"),
            vmem_limit_bytes=32 * 1024 * 1024),
    )(xp, xp, w_flat, scale, shift)
    return out


def reference_forward(x, w3, b3, w7, b7, w11, b11, gamma, beta):
    """Pure-JAX reference mirroring the PyTorch forward (training-mode BN)."""
    def conv1d(x, w, b, pad):
        y = jax.lax.conv_general_dilated(
            x, w, window_strides=(1,), padding=[(pad, pad)],
            dimension_numbers=("NCH", "OIH", "NCH"))
        return y + b[None, :, None]

    y = jnp.concatenate(
        [conv1d(x, w3, b3, 1), conv1d(x, w7, b7, 3), conv1d(x, w11, b11, 5)],
        axis=1)
    mean = y.mean(axis=(0, 2), keepdims=True)
    var = ((y - mean) ** 2).mean(axis=(0, 2), keepdims=True)
    yn = (y - mean) * jax.lax.rsqrt(var + BN_EPS)
    yb = yn * gamma[None, :, None] + beta[None, :, None]
    return jnp.where(yb >= 0, yb, LEAKY_SLOPE * yb)


if __name__ == "__main__":
    B, C_in, L = 2, 4, 16
    out_channels = 12
    C3 = out_channels // 3

    key = jax.random.PRNGKey(0)
    keys = jax.random.split(key, 12)

    def conv_init(kw, kb, c_out, c_in, ksize):
        bound = 1.0 / np.sqrt(c_in * ksize)
        w = jax.random.uniform(kw, (c_out, c_in, ksize), jnp.float32, -bound, bound)
        b = jax.random.uniform(kb, (c_out,), jnp.float32, -bound, bound)
        return w, b

    x = jax.random.normal(keys[0], (B, C_in, L), jnp.float32)
    w3, b3 = conv_init(keys[1], keys[2], C3, C_in, 3)
    w7, b7 = conv_init(keys[3], keys[4], C3, C_in, 7)
    w11, b11 = conv_init(keys[5], keys[6], C3, C_in, 11)
    # BN affine params (PyTorch default gamma=1, beta=0; perturb so the path is used).
    gamma = 1.0 + 0.1 * jax.random.normal(keys[7], (out_channels,), jnp.float32)
    beta = 0.1 * jax.random.normal(keys[8], (out_channels,), jnp.float32)

    out = spectral_conv_block(x, w3, b3, w7, b7, w11, b11, gamma, beta)
    out = jax.block_until_ready(out)
    ref = reference_forward(x, w3, b3, w7, b7, w11, b11, gamma, beta)
    np.testing.assert_allclose(np.asarray(out), np.asarray(ref), rtol=1e-3, atol=1e-3)

    # Extra self-check: multi-tile + split-reduction + partial-last-block path
    # (small LT cap so L=300 spans several lane tiles and L is not a multiple of 128).
    x2 = jax.random.normal(keys[9], (B, C_in, 300), jnp.float32)
    out2 = spectral_conv_block(x2, w3, b3, w7, b7, w11, b11, gamma, beta, max_lt=128)
    out2 = jax.block_until_ready(out2)
    ref2 = reference_forward(x2, w3, b3, w7, b7, w11, b11, gamma, beta)
    np.testing.assert_allclose(np.asarray(out2), np.asarray(ref2), rtol=1e-3, atol=1e-3)

    print("KERNEL_OK")
</pallas_src>

<mosaic_0001>
module attributes {stable_mosaic.version = 11 : i64} {
  func.func @_stats_kernel(%arg0: i32, %arg1: i32, %arg2: i32, %arg3: memref<1x4x128xf32, #tpu.memory_space<vmem>>, %arg4: memref<1x4x128xf32, #tpu.memory_space<vmem>>, %arg5: memref<12x44xf32, #tpu.memory_space<vmem>>, %arg6: memref<1x1x24x128xf32, #tpu.memory_space<vmem>>) attributes {dimension_semantics = [#tpu.dimension_semantics<parallel>, #tpu.dimension_semantics<parallel>, #tpu.dimension_semantics<arbitrary>], iteration_bounds = array<i64: 2, 1, 1>, scalar_prefetch = 0 : i64, scratch_operands = 0 : i64, tpu.core_type = #tpu.core_type<tc>, window_params = [{transform_indices = @transform_0, window_bounds = array<i64: 1, 4, 128>}, {transform_indices = @transform_1, window_bounds = array<i64: 1, 4, 128>}, {pipeline_mode = #tpu.pipeline_mode<synchronous>, transform_indices = @transform_2, window_bounds = array<i64: 12, 44>}, {transform_indices = @transform_3, window_bounds = array<i64: 1, 1, 24, 128>}]} {
    %c1_i32 = arith.constant 1 : i32
    %0 = arith.muli %arg1, %c1_i32 : i32
    %1 = arith.addi %0, %arg2 : i32
    %c128_i32 = arith.constant 128 : i32
    %2 = arith.muli %1, %c128_i32 : i32
    %c0 = arith.constant 0 : index
    %c0_0 = arith.constant 0 : index
    %c0_1 = arith.constant 0 : index
    %3 = vector.load %arg3[%c0, %c0_0, %c0_1] : memref<1x4x128xf32, #tpu.memory_space<vmem>>, vector<1x4x128xf32>
    %4 = vector.shape_cast %3 : vector<1x4x128xf32> to vector<4x128xf32>
    %c0_2 = arith.constant 0 : index
    %c0_3 = arith.constant 0 : index
    %c0_4 = arith.constant 0 : index
    %5 = vector.load %arg4[%c0_2, %c0_3, %c0_4] : memref<1x4x128xf32, #tpu.memory_space<vmem>>, vector<1x4x128xf32>
    %6 = vector.shape_cast %5 : vector<1x4x128xf32> to vector<4x128xf32>
    %c0_5 = arith.constant 0 : index
    %c0_6 = arith.constant 0 : index
    %7 = vector.load %arg5[%c0_5, %c0_6] : memref<12x44xf32, #tpu.memory_space<vmem>>, vector<12x44xf32>
    %8 = tpu.concatenate %4, %6 in 1 : vector<4x128xf32>, vector<4x128xf32> -> vector<4x256xf32>
    %c255_i32 = arith.constant 255 : i32
    %9 = tpu.dynamic_rotate %8 by %c255_i32 dim 1 : vector<4x256xf32>, i32 -> vector<4x256xf32>
    %10 = vector.extract_strided_slice %9 {offsets = [0, 0], sizes = [4, 128], strides = [1, 1]} : vector<4x256xf32> to vector<4x128xf32>
    %c254_i32 = arith.constant 254 : i32
    %11 = tpu.dynamic_rotate %8 by %c254_i32 dim 1 : vector<4x256xf32>, i32 -> vector<4x256xf32>
    %12 = vector.extract_strided_slice %11 {offsets = [0, 0], sizes = [4, 128], strides = [1, 1]} : vector<4x256xf32> to vector<4x128xf32>
    %c253_i32 = arith.constant 253 : i32
    %13 = tpu.dynamic_rotate %8 by %c253_i32 dim 1 : vector<4x256xf32>, i32 -> vector<4x256xf32>
    %14 = vector.extract_strided_slice %13 {offsets = [0, 0], sizes = [4, 128], strides = [1, 1]} : vector<4x256xf32> to vector<4x128xf32>
    %c252_i32 = arith.constant 252 : i32
    %15 = tpu.dynamic_rotate %8 by %c252_i32 dim 1 : vector<4x256xf32>, i32 -> vector<4x256xf32>
    %16 = vector.extract_strided_slice %15 {offsets = [0, 0], sizes = [4, 128], strides = [1, 1]} : vector<4x256xf32> to vector<4x128xf32>
    %c251_i32 = arith.constant 251 : i32
    %17 = tpu.dynamic_rotate %8 by %c251_i32 dim 1 : vector<4x256xf32>, i32 -> vector<4x256xf32>
    %18 = vector.extract_strided_slice %17 {offsets = [0, 0], sizes = [4, 128], strides = [1, 1]} : vector<4x256xf32> to vector<4x128xf32>
    %c250_i32 = arith.constant 250 : i32
    %19 = tpu.dynamic_rotate %8 by %c250_i32 dim 1 : vector<4x256xf32>, i32 -> vector<4x256xf32>
    %20 = vector.extract_strided_slice %19 {offsets = [0, 0], sizes = [4, 128], strides = [1, 1]} : vector<4x256xf32> to vector<4x128xf32>
    %c249_i32 = arith.constant 249 : i32
    %21 = tpu.dynamic_rotate %8 by %c249_i32 dim 1 : vector<4x256xf32>, i32 -> vector<4x256xf32>
    %22 = vector.extract_strided_slice %21 {offsets = [0, 0], sizes = [4, 128], strides = [1, 1]} : vector<4x256xf32> to vector<4x128xf32>
    %c248_i32 = arith.constant 248 : i32
    %23 = tpu.dynamic_rotate %8 by %c248_i32 dim 1 : vector<4x256xf32>, i32 -> vector<4x256xf32>
    %24 = vector.extract_strided_slice %23 {offsets = [0, 0], sizes = [4, 128], strides = [1, 1]} : vector<4x256xf32> to vector<4x128xf32>
    %c247_i32 = arith.constant 247 : i32
    %25 = tpu.dynamic_rotate %8 by %c247_i32 dim 1 : vector<4x256xf32>, i32 -> vector<4x256xf32>
    %26 = vector.extract_strided_slice %25 {offsets = [0, 0], sizes = [4, 128], strides = [1, 1]} : vector<4x256xf32> to vector<4x128xf32>
    %c246_i32 = arith.constant 246 : i32
    %27 = tpu.dynamic_rotate %8 by %c246_i32 dim 1 : vector<4x256xf32>, i32 -> vector<4x256xf32>
    %28 = vector.extract_strided_slice %27 {offsets = [0, 0], sizes = [4, 128], strides = [1, 1]} : vector<4x256xf32> to vector<4x128xf32>
    %29 = tpu.concatenate %4, %10, %12, %14, %16, %18, %20, %22, %24, %26, %28 in 0 : vector<4x128xf32>, vector<4x128xf32>, vector<4x128xf32>, vector<4x128xf32>, vector<4x128xf32>, vector<4x128xf32>, vector<4x128xf32>, vector<4x128xf32>, vector<4x128xf32>, vector<4x128xf32>, vector<4x128xf32> -> vector<44x128xf32>
    %cst = arith.constant dense<0.000000e+00> : vector<12x128xf32>
    %30 = tpu.matmul %7, %29, %cst {dimension_numbers = #tpu.dot_dimension_numbers<[1], [0], [0], [1], [0, 0, 1, 1], [], []>} : vector<12x44xf32>, vector<44x128xf32>, vector<12x128xf32> -> vector<12x128xf32>
    %c0_i32 = arith.constant 0 : i32
    %31 = arith.cmpi eq, %arg2, %c0_i32 : i32
    %32 = arith.extui %31 : i1 to i32
    %c0_i32_7 = arith.constant 0 : i32
    %33 = arith.cmpi ne, %32, %c0_i32_7 : i32
    scf.if %33 {
      %cst_11 = arith.constant 0.000000e+00 : f32
      %41 = vector.broadcast %cst_11 : f32 to vector<24x128xf32>
      %c0_12 = arith.constant 0 : index
      %c0_13 = arith.constant 0 : index
      %c0_14 = arith.constant 0 : index
      %c0_15 = arith.constant 0 : index
      %42 = vector.load %arg6[%c0_12, %c0_13, %c0_14, %c0_15] : memref<1x1x24x128xf32, #tpu.memory_space<vmem>>, vector<1x1x24x128xf32>
      %43 = vector.shape_cast %42 : vector<1x1x24x128xf32> to vector<24x128xf32>
      %44 = vector.shape_cast %41 : vector<24x128xf32> to vector<1x1x24x128xf32>
      tpu.vector_store %arg6[%c0_12, %c0_13, %c0_14, %c0_15], %44 {strides = array<i32>} : memref<1x1x24x128xf32, #tpu.memory_space<vmem>>, vector<1x1x24x128xf32>,
    } else {
    }
    %c128_i32_8 = arith.constant 128 : i32
    %34 = arith.addi %2, %c128_i32_8 : i32
    %c16_i32 = arith.constant 16 : i32
    %35 = arith.cmpi sle, %34, %c16_i32 : i32
    %36 = arith.extui %35 : i1 to i32
    %c0_i32_9 = arith.constant 0 : i32
    %37 = arith.cmpi ne, %36, %c0_i32_9 : i32
    scf.if %37 {
      %c0_11 = arith.constant 0 : index
      %c0_12 = arith.constant 0 : index
      %c0_13 = arith.constant 0 : index
      %c0_14 = arith.constant 0 : index
      %41 = vector.load %arg6[%c0_11, %c0_12, %c0_13, %c0_14] : memref<1x1x24x128xf32, #tpu.memory_space<vmem>>, vector<1x1x24x128xf32>
      %42 = vector.shape_cast %41 : vector<1x1x24x128xf32> to vector<24x128xf32>
      %cst_15 = arith.constant 0.000000e+00 : f32
      %43 = vector.broadcast %cst_15 : f32 to vector<12x128xf32>
      %cst_16 = arith.constant 0.000000e+00 : f32
      %44 = vector.broadcast %cst_16 : f32 to vector<12x128xf32>
      %45 = arith.addf %43, %30 : vector<12x128xf32>
      %46 = arith.mulf %30, %30 : vector<12x128xf32>
      %47 = arith.addf %44, %46 : vector<12x128xf32>
      %48 = tpu.concatenate %45, %47 in 0 : vector<12x128xf32>, vector<12x128xf32> -> vector<24x128xf32>
      %49 = arith.addf %42, %48 : vector<24x128xf32>
      %c0_17 = arith.constant 0 : index
      %c0_18 = arith.constant 0 : index
      %c0_19 = arith.constant 0 : index
      %c0_20 = arith.constant 0 : index
      %50 = vector.load %arg6[%c0_17, %c0_18, %c0_19, %c0_20] : memref<1x1x24x128xf32, #tpu.memory_space<vmem>>, vector<1x1x24x128xf32>
      %51 = vector.shape_cast %50 : vector<1x1x24x128xf32> to vector<24x128xf32>
      %52 = vector.shape_cast %49 : vector<24x128xf32> to vector<1x1x24x128xf32>
      tpu.vector_store %arg6[%c0_17, %c0_18, %c0_19, %c0_20], %52 {strides = array<i32>} : memref<1x1x24x128xf32, #tpu.memory_space<vmem>>, vector<1x1x24x128xf32>,
    } else {
    }
    %true = arith.constant true
    %38 = arith.xori %35, %true : i1
    %39 = arith.extui %38 : i1 to i32
    %c0_i32_10 = arith.constant 0 : i32
    %40 = arith.cmpi ne, %39, %c0_i32_10 : i32
    scf.if %40 {
      %41 = tpu.iota {dimensions = array<i32: 1>} : vector<12x128xi32>
      %42 = vector.broadcast %2 : i32 to vector<12x128xi32>
      %43 = arith.addi %41, %42 : vector<12x128xi32>
      %c16_i32_11 = arith.constant 16 : i32
      %44 = vector.broadcast %c16_i32_11 : i32 to vector<12x128xi32>
      %45 = arith.cmpi slt, %43, %44 : vector<12x128xi32>
      %cst_12 = arith.constant 0.000000e+00 : f32
      %46 = vector.broadcast %cst_12 : f32 to vector<12x128xf32>
      %47 = arith.select %45, %30, %46 : vector<12x128xi1>, vector<12x128xf32>
      %c0_13 = arith.constant 0 : index
      %c0_14 = arith.constant 0 : index
      %c0_15 = arith.constant 0 : index
      %c0_16 = arith.constant 0 : index
      %48 = vector.load %arg6[%c0_13, %c0_14, %c0_15, %c0_16] : memref<1x1x24x128xf32, #tpu.memory_space<vmem>>, vector<1x1x24x128xf32>
      %49 = vector.shape_cast %48 : vector<1x1x24x128xf32> to vector<24x128xf32>
      %cst_17 = arith.constant 0.000000e+00 : f32
      %50 = vector.broadcast %cst_17 : f32 to vector<12x128xf32>
      %cst_18 = arith.constant 0.000000e+00 : f32
      %51 = vector.broadcast %cst_18 : f32 to vector<12x128xf32>
      %52 = arith.addf %50, %47 : vector<12x128xf32>
      %53 = arith.mulf %47, %47 : vector<12x128xf32>
      %54 = arith.addf %51, %53 : vector<12x128xf32>
      %55 = tpu.concatenate %52, %54 in 0 : vector<12x128xf32>, vector<12x128xf32> -> vector<24x128xf32>
      %56 = arith.addf %49, %55 : vector<24x128xf32>
      %c0_19 = arith.constant 0 : index
      %c0_20 = arith.constant 0 : index
      %c0_21 = arith.constant 0 : index
      %c0_22 = arith.constant 0 : index
      %57 = vector.load %arg6[%c0_19, %c0_20, %c0_21, %c0_22] : memref<1x1x24x128xf32, #tpu.memory_space<vmem>>, vector<1x1x24x128xf32>
      %58 = vector.shape_cast %57 : vector<1x1x24x128xf32> to vector<24x128xf32>
      %59 = vector.shape_cast %56 : vector<24x128xf32> to vector<1x1x24x128xf32>
      tpu.vector_store %arg6[%c0_19, %c0_20, %c0_21, %c0_22], %59 {strides = array<i32>} : memref<1x1x24x128xf32, #tpu.memory_space<vmem>>, vector<1x1x24x128xf32>,
    } else {
    }
    return
  }
  func.func @transform_0(%arg0: i32, %arg1: i32, %arg2: i32) -> (i32, i32, i32) {
    %c1_i32 = arith.constant 1 : i32
    %0 = arith.muli %arg1, %c1_i32 : i32
    %1 = arith.addi %0, %arg2 : i32
    %c0_i32 = arith.constant 0 : i32
    %c0_i32_0 = arith.constant 0 : i32
    return %arg0, %c0_i32, %1 : i32, i32, i32
  }
  func.func @transform_1(%arg0: i32, %arg1: i32, %arg2: i32) -> (i32, i32, i32) {
    %c1_i32 = arith.constant 1 : i32
    %0 = arith.muli %arg1, %c1_i32 : i32
    %1 = arith.addi %0, %arg2 : i32
    %c1_i32_0 = arith.constant 1 : i32
    %2 = arith.addi %1, %c1_i32_0 : i32
    %c1_i32_1 = arith.constant 1 : i32
    %3 = arith.muli %2, %c1_i32_1 : i32
    %c0_i32 = arith.constant 0 : i32
    %c0_i32_2 = arith.constant 0 : i32
    return %arg0, %c0_i32, %3 : i32, i32, i32
  }
  func.func @transform_2(%arg0: i32, %arg1: i32, %arg2: i32) -> (i32, i32) {
    %c0_i32 = arith.constant 0 : i32
    %c0_i32_0 = arith.constant 0 : i32
    %c0_i32_1 = arith.constant 0 : i32
    return %c0_i32, %c0_i32_0 : i32, i32
  }
  func.func @transform_3(%arg0: i32, %arg1: i32, %arg2: i32) -> (i32, i32, i32, i32) {
    %c0_i32 = arith.constant 0 : i32
    %c0_i32_0 = arith.constant 0 : i32
    %c0_i32_1 = arith.constant 0 : i32
    return %arg0, %arg1, %c0_i32, %c0_i32_0 : i32, i32, i32, i32
  }
}

</mosaic_0001>

<llo_original>
// kernel: tpu_custom_call.1
$region0: #{tpu_custom_call.1}
  #allocation0 [shape = 'u32[]', space=smem, size = 0x4, offset = 0x4, fixed_abs, tag = 'smem constant byte address 0x4 - core index']
  #allocation1 [shape = 'u32[144,128]{1,0:T(1,128)}', space=vmem, size = 0x12000, scoped, tag = 'internal scratch']
  %s0 = inlined_call_operand.hbm [shape: f32[2,4,256], index: 0, kind: input, shape index: {}]
  %s1 = inlined_call_operand.hbm [shape: f32[2,4,256], index: 1, kind: input, shape index: {}]
  %s2 = inlined_call_operand.hbm [shape: f32[12,44], index: 2, kind: input, shape index: {}]
  %s3 = inlined_call_operand.hbm [shape: f32[2,1,24,128], index: 3, kind: output, shape index: {}]
  %s4 = sld [smem:[#allocation0]]
  $region69: #{tpu_custom_call.1} parent=0
    _
  %s6 = ssub.s32 1, %s4
  %s7 = scalar_select 0, %s6, %s4
  $region1: #{tpu_custom_call.1} parent=0
    #allocation2 [shape = 'u8[4096]{0}', space=vmem, size = 0x1000, scoped, tag = 'input window, operand 0']
    #allocation3 [shape = 's32[2]{0}', space=sflag, size = 0x8, scoped, tag = 'scoped memory for tpu_custom_call.1']
    #allocation4 [shape = 's32[2]{0}', space=sflag, size = 0x8, scoped, tag = 'scoped memory for tpu_custom_call.1']
    #allocation5 [shape = 'u8[4096]{0}', space=vmem, size = 0x1000, scoped, tag = 'input window, operand 1']
    #allocation6 [shape = 's32[2]{0}', space=sflag, size = 0x8, scoped, tag = 'scoped memory for tpu_custom_call.1']
    #allocation7 [shape = 'u8[8192]{0}', space=vmem, size = 0x2000, scoped, tag = 'input window, operand 2, single buffered']
    #allocation8 [shape = 'u8[24576]{0}', space=vmem, size = 0x6000, scoped, tag = 'output window, operand 0']
    %8 = vsyncpa [#allocation3], 0
    %s9 = scalar_lea.sflag [#allocation3], 1
    %10 = vsyncpa %s9, 0
    %11 = vsyncpa [#allocation6], 0
    %s12 = scalar_lea.sflag [#allocation6], 1
    %13 = vsyncpa %s12, 0
    %14 = vsyncpa [#allocation4], 0
    %s15 = scalar_lea.sflag [#allocation4], 1
    %16 = vsyncpa %s15, 0
    loop: start=0, step=1, limit=4
    $region2: #{tpu_custom_call.1} parent=1 // loop_pre_header
      _
    $region3: #{tpu_custom_call.1} parent=1 // loop_header
      %s18 = sphi 0, %s22
      %p19 = scmp.ge.s32.totalorder %s18, 4
      %s25 = sphi 0, %s44
      %s26 = sphi 0, %s40
      %s27 = sphi 0, %s36
      %s28 = sphi 0, %s25
      %s29 = sphi 0, %s26
      %s30 = sphi 0, %s27
      %s31 = sphi 0, %s28
      %s32 = sphi 0, %s29
      %s33 = sphi 0, %s30
      %s51 = sphi 0, %s53
      %s54 = sphi 0, %s51
      %s55 = sphi 0, %s54
      %s71 = sphi 0, %s55
      %s83 = sphi 0, %s85
      %s86 = sphi 0, %s83
      %s87 = sphi 0, %s86
      %s103 = sphi 0, %s87
      %s107 = sphi 0, %s107
      %s109 = sphi 0, %s107
      %s110 = sphi 0, %s109
      %s124 = sphi 0, %s110
      %s132 = sphi 0, %s134
      %s135 = sphi 0, %s132
      %s136 = sphi 0, %s135
      %s152 = sphi 0, %s136
    $region4: #{tpu_custom_call.1} parent=1 // loop_header_branch
      %21 = sbr.rel (%p19) target = $region8
    $region5: #{tpu_custom_call.1} parent=1 // loop_body
      %s23 = ssub.s32 %s18, 1
      %s24 = ssub.s32 %s18, 2
      %s34 = sadd.s32 1, %s27
      %p35 = scmp.ge.s32.totalorder %s34, 1
      %s36 = scalar_select %p35, 0, %s34
      %s37 = sadd.s32 1, %s26
      %s38 = scalar_select %p35, %s37, %s26
      %p39 = scmp.ge.s32.totalorder %s38, 1
      %s40 = scalar_select %p39, 0, %s38
      %s41 = sadd.s32 1, %s25
      %s42 = scalar_select %p39, %s41, %s25
      %p43 = scmp.ge.s32.totalorder %s42, 2
      %s44 = scalar_select %p43, 0, %s42
      %s45 = sadd.s32 %s26, %s27
      %s46 = sadd.s32 %s40, %s36
      %s47 = ssub.s32 %s25, %s44
      %s48 = ssub.s32 %s45, %s46
      %s49 = sor.u32 %s47, %s48
      %p50 = scmp.eq.s32.totalorder %s49, 0
      %s52 = sadd.s32 %s51, 1
      %s53 = scalar_select %p50, %s51, %s52
      %p56 = pneg %p50
      %p57 = scmp.eq.s32.totalorder %s18, 1
      %p58 = por %p56, %p57
      %p59 = scmp.ne.s32.totalorder %s51, %s54
      %p60 = scmp.eq.s32.totalorder %s18, 0
      %p61 = por %p59, %p60
      %p62 = scmp.ne.s32.totalorder %s51, %s54
      %p63 = scmp.eq.s32.totalorder %s23, 1
      %p64 = por %p62, %p63
      %p65 = scmp.ne.s32.totalorder %s54, %s55
      %p66 = scmp.eq.s32.totalorder %s23, 0
      %p67 = por %p65, %p66
      %p68 = scmp.ne.s32.totalorder %s54, %s55
      %p69 = scmp.eq.s32.totalorder %s24, 1
      %p70 = por %p68, %p69
      %p72 = scmp.ne.s32.totalorder %s55, %s71
      %p73 = scmp.eq.s32.totalorder %s24, 0
      %p74 = por %p72, %p73
      %s75 = sadd.s32 %s26, %s27
      %s76 = sadd.s32 %s75, 1
      %s77 = sadd.s32 %s40, %s36
      %s78 = sadd.s32 %s77, 1
      %s79 = ssub.s32 %s25, %s44
      %s80 = ssub.s32 %s76, %s78
      %s81 = sor.u32 %s79, %s80
      %p82 = scmp.eq.s32.totalorder %s81, 0
      %s84 = sadd.s32 %s83, 1
      %s85 = scalar_select %p82, %s83, %s84
      %p88 = pneg %p82
      %p89 = scmp.eq.s32.totalorder %s18, 1
      %p90 = por %p88, %p89
      %p91 = scmp.ne.s32.totalorder %s83, %s86
      %p92 = scmp.eq.s32.totalorder %s18, 0
      %p93 = por %p91, %p92
      %p94 = scmp.ne.s32.totalorder %s83, %s86
      %p95 = scmp.eq.s32.totalorder %s23, 1
      %p96 = por %p94, %p95
      %p97 = scmp.ne.s32.totalorder %s86, %s87
      %p98 = scmp.eq.s32.totalorder %s23, 0
      %p99 = por %p97, %p98
      %p100 = scmp.ne.s32.totalorder %s86, %s87
      %p101 = scmp.eq.s32.totalorder %s24, 1
      %p102 = por %p100, %p101
      %p104 = scmp.ne.s32.totalorder %s87, %s103
      %p105 = scmp.eq.s32.totalorder %s24, 0
      %p106 = por %p104, %p105
      %s108 = sadd.s32 %s107, 1
      %p111 = scmp.eq.s32.totalorder %s18, 1
      %p112 = scmp.ne.s32.totalorder %s107, %s109
      %p113 = scmp.eq.s32.totalorder %s18, 0
      %p114 = por %p112, %p113
      %p115 = scmp.ne.s32.totalorder %s107, %s109
      %p116 = scmp.eq.s32.totalorder %s23, 1
      %p117 = por %p115, %p116
      %p118 = scmp.ne.s32.totalorder %s109, %s110
      %p119 = scmp.eq.s32.totalorder %s23, 0
      %p120 = por %p118, %p119
      %p121 = scmp.ne.s32.totalorder %s109, %s110
      %p122 = scmp.eq.s32.totalorder %s24, 1
      %p123 = por %p121, %p122
      %p125 = scmp.ne.s32.totalorder %s110, %s124
      %p126 = scmp.eq.s32.totalorder %s24, 0
      %p127 = por %p125, %p126
      %s128 = ssub.s32 %s25, %s44
      %s129 = ssub.s32 %s26, %s40
      %s130 = sor.u32 %s128, %s129
      %p131 = scmp.eq.s32.totalorder %s130, 0
      %s133 = sadd.s32 %s132, 1
      %s134 = scalar_select %p131, %s132, %s133
      %p137 = pneg %p131
      %p138 = scmp.eq.s32.totalorder %s18, 1
      %p139 = por %p137, %p138
      %p140 = scmp.ne.s32.totalorder %s132, %s135
      %p141 = scmp.eq.s32.totalorder %s18, 0
      %p142 = por %p140, %p141
      %p143 = scmp.ne.s32.totalorder %s132, %s135
      %p144 = scmp.eq.s32.totalorder %s23, 1
      %p145 = por %p143, %p144
      %p146 = scmp.ne.s32.totalorder %s135, %s136
      %p147 = scmp.eq.s32.totalorder %s23, 0
      %p148 = por %p146, %p147
      %p149 = scmp.ne.s32.totalorder %s135, %s136
      %p150 = scmp.eq.s32.totalorder %s24, 1
      %p151 = por %p149, %p150
      %p153 = scmp.ne.s32.totalorder %s136, %s152
      %p154 = scmp.eq.s32.totalorder %s24, 0
      %p155 = por %p153, %p154
      %p156 = scmp.le.s32.totalorder 1, %s18
      %p157 = scmp.lt.s32.totalorder %s18, 3
      %p158 = pnand %p156, %p157
      %p159 = pneg %p158
      // Predicated region
      $region9: #{tpu_custom_call.1} parent=5 // pred_check
        _
      $region10: #{tpu_custom_call.1} parent=5 // pred_check_branch
        %161 = sbr.rel (%p158) target = $region12
      $region11: #{tpu_custom_call.1} parent=5 // pred_region
        %s162 = ssub.s32 %s18, 1
        // Predicated region
        $region13: #{tpu_custom_call.1} parent=11 // pred_check
          %p163 = pneg %p120
        $region14: #{tpu_custom_call.1} parent=11 // pred_check_branch
          %165 = sbr.rel (%p163) target = $region16
        $region15: #{tpu_custom_call.1} parent=11 // pred_region
          %s167 = ssub.s32 256, 256
          %168 = vsyncadd [#allocation6], %s167
          %s169 = sshll.u32 [#allocation7], 4
          %s170 = int_to_ptr.vmem [resolvable:$true] %s169
          %175 = dma.hbm_to_vmem [thread:$0]  %s2, 256, %s170, [#allocation6], 128, 128, 8
        $region16: #{tpu_custom_call.1} parent=11 // pred_fallthru
          _
      $region12: #{tpu_custom_call.1} parent=5 // pred_fallthru
        _
      %p176 = scmp.lt.s32.totalorder %s18, 2
      // Predicated region
      $region17: #{tpu_custom_call.1} parent=5 // pred_check
        %p177 = pneg %p176
      $region18: #{tpu_custom_call.1} parent=5 // pred_check_branch
        %179 = sbr.rel (%p177) target = $region20
      $region19: #{tpu_custom_call.1} parent=5 // pred_region
        // Predicated region
        $region21: #{tpu_custom_call.1} parent=19 // pred_check
          %p180 = pneg %p61
        $region22: #{tpu_custom_call.1} parent=19 // pred_check_branch
          %182 = sbr.rel (%p180) target = $region24
        $region23: #{tpu_custom_call.1} parent=19 // pred_region
          %s183 = sand.u32 %s51, 1
          %s184 = scalar_lea.sflag [#allocation3], %s183
          %s185 = sand.u32 %s51, 1
          %s186 = smul.addr %s185, 4
          %s187 = scalar_lea.vmem [#allocation2], %s186
          %s188 = sadd.s32 %s26, %s27
          %s190 = ssub.s32 64, 64
          %191 = vsyncadd %s184, %s190
          %s192 = smul.addr %s25, 2
          %s193 = sadd.s32 %s188, %s192
          %s194 = smul.addr %s193, 64
          %s195 = scalar_lea.hbm %s0, %s194
          %s197 = sshll.u32 %s187, 4
          %s198 = int_to_ptr.vmem [resolvable:$true] %s197
          %200 = dma.hbm_to_vmem [thread:$0]  %s195, 64, %s198, %s184
        $region24: #{tpu_custom_call.1} parent=19 // pred_fallthru
          _
        // Predicated region
        $region25: #{tpu_custom_call.1} parent=19 // pred_check
          %p201 = pneg %p93
        $region26: #{tpu_custom_call.1} parent=19 // pred_check_branch
          %203 = sbr.rel (%p201) target = $region28
        $region27: #{tpu_custom_call.1} parent=19 // pred_region
          %s204 = sand.u32 %s18, 1
          %s205 = scalar_lea.sflag [#allocation6], %s204
          %s206 = sand.u32 %s83, 1
          %s207 = smul.addr %s206, 4
          %s208 = scalar_lea.vmem [#allocation5], %s207
          %s209 = sadd.s32 %s26, %s27
          %s210 = sadd.s32 %s209, 1
          %s212 = ssub.s32 64, 64
          %213 = vsyncadd %s205, %s212
          %s214 = smul.addr %s25, 2
          %s215 = sadd.s32 %s210, %s214
          %s216 = smul.addr %s215, 64
          %s217 = scalar_lea.hbm %s1, %s216
          %s219 = sshll.u32 %s208, 4
          %s220 = int_to_ptr.vmem [resolvable:$true] %s219
          %222 = dma.hbm_to_vmem [thread:$0]  %s217, 64, %s220, %s205
        $region28: #{tpu_custom_call.1} parent=19 // pred_fallthru
          _
      $region20: #{tpu_custom_call.1} parent=5 // pred_fallthru
        _
      %p223 = scmp.le.s32.totalorder 1, %s18
      %p224 = scmp.lt.s32.totalorder %s18, 3
      %p225 = pnand %p223, %p224
      %p226 = pneg %p225
      // Predicated region
      $region29: #{tpu_custom_call.1} parent=5 // pred_check
        _
      $region30: #{tpu_custom_call.1} parent=5 // pred_check_branch
        %228 = sbr.rel (%p225) target = $region32
      $region31: #{tpu_custom_call.1} parent=5 // pred_region
        %s229 = ssub.s32 %s18, 1
        %s230 = sand.u32 %s54, 1
        %s231 = scalar_lea.sflag [#allocation3], %s230
        %s232 = sand.u32 %s54, 1
        %s233 = smul.addr %s232, 4
        %s234 = scalar_lea.vmem [#allocation2], %s233
        // Predicated region
        $region33: #{tpu_custom_call.1} parent=31 // pred_check
          %p235 = pneg %p67
        $region34: #{tpu_custom_call.1} parent=31 // pred_check_branch
          %237 = sbr.rel (%p235) target = $region36
        $region35: #{tpu_custom_call.1} parent=31 // pred_region
          %238 = dma.done %s231, 64
        $region36: #{tpu_custom_call.1} parent=31 // pred_fallthru
          _
        %s239 = sand.u32 %s23, 1
        %s240 = scalar_lea.sflag [#allocation6], %s239
        %s241 = sand.u32 %s86, 1
        %s242 = smul.addr %s241, 4
        %s243 = scalar_lea.vmem [#allocation5], %s242
        // Predicated region
        $region37: #{tpu_custom_call.1} parent=31 // pred_check
          %p244 = pneg %p99
        $region38: #{tpu_custom_call.1} parent=31 // pred_check_branch
          %246 = sbr.rel (%p244) target = $region40
        $region39: #{tpu_custom_call.1} parent=31 // pred_region
          %247 = dma.done %s240, 64
        $region40: #{tpu_custom_call.1} parent=31 // pred_fallthru
          _
        // Predicated region
        $region41: #{tpu_custom_call.1} parent=31 // pred_check
          %p248 = pneg %p120
        $region42: #{tpu_custom_call.1} parent=31 // pred_check_branch
          %250 = sbr.rel (%p248) target = $region44
        $region43: #{tpu_custom_call.1} parent=31 // pred_region
          %251 = dma.done [#allocation6], 256
        $region44: #{tpu_custom_call.1} parent=31 // pred_fallthru
          _
        %s252 = sand.u32 %s54, 1
        %s253 = scalar_lea.sflag [#allocation3], %s252
        %s254 = sand.u32 %s54, 1
        %s255 = smul.addr %s254, 4
        %s256 = scalar_lea.vmem [#allocation2], %s255
        %p257 = pneg %p67
        %p258 = pneg %p64
        %s259 = sand.u32 %s23, 1
        %s260 = scalar_lea.sflag [#allocation6], %s259
        %s261 = sand.u32 %s86, 1
        %s262 = smul.addr %s261, 4
        %s263 = scalar_lea.vmem [#allocation5], %s262
        %p264 = pneg %p99
        %p265 = pneg %p96
        %p266 = pneg %p120
        %p267 = pneg %p117
        %p268 = pneg %p148
        %p269 = pneg %p145
        %s270 = sand.u32 %s135, 1
        %s271 = scalar_lea.sflag [#allocation4], %s270
        %s272 = sand.u32 %s135, 1
        %s273 = smul.addr %s272, 24
        %s274 = scalar_lea.vmem [#allocation8], %s273
        %s275 = sadd.s32 %s29, %s30
        %s276 = sadd.s32 %s29, %s30
        %s277 = sadd.s32 %s276, 1
        %s278 = sadd.s32 %s29, %s30
        %s279 = smul.u32 %s278, 128
        %v280 = vld [vmem:[%s234] sm:$0xf]
        %v281 = vld [vmem:[%s243] sm:$0xf]
        %v282 = vld [vmem:[#allocation7] sm:$0xff]
        %v283 = vld [vmem:[#allocation7 + $0x8] sm:$0xf]
        %284 = vrot.lane.b32.xlu0 %v280, 127
        %v285 = vpop.permute.xlu0 %284
        %286 = vrot.lane.b32.xlu0 %v281, 127
        %v287 = vpop.permute.xlu0 %286
        %v288 = vlaneseq
        %v289 = vand.u32 %v288, 127
        %vm290 = vcmp.lt.s32.totalorder %v289, 127
        %v291 = vsel %vm290, %v285, %v287
        %292 = vrot.lane.b32.xlu0 %v280, 126
        %v293 = vpop.permute.xlu0 %292
        %294 = vrot.lane.b32.xlu0 %v281, 126
        %v295 = vpop.permute.xlu0 %294
        %vm296 = vcmp.lt.s32.totalorder %v289, 126
        %v297 = vsel %vm296, %v293, %v295
        %298 = vrot.lane.b32.xlu0 %v280, 125
        %v299 = vpop.permute.xlu0 %298
        %300 = vrot.lane.b32.xlu0 %v281, 125
        %v301 = vpop.permute.xlu0 %300
        %vm302 = vcmp.lt.s32.totalorder %v289, 125
        %v303 = vsel %vm302, %v299, %v301
        %304 = vrot.lane.b32.xlu0 %v280, 124
        %v305 = vpop.permute.xlu0 %304
        %306 = vrot.lane.b32.xlu0 %v281, 124
        %v307 = vpop.permute.xlu0 %306
        %vm308 = vcmp.lt.s32.totalorder %v289, 124
        %v309 = vsel %vm308, %v305, %v307
        %310 = vrot.lane.b32.xlu0 %v280, 123
        %v311 = vpop.permute.xlu0 %310
        %312 = vrot.lane.b32.xlu0 %v281, 123
        %v313 = vpop.permute.xlu0 %312
        %vm314 = vcmp.lt.s32.totalorder %v289, 123
        %v315 = vsel %vm314, %v311, %v313
        %316 = vrot.lane.b32.xlu0 %v280, 122
        %v317 = vpop.permute.xlu0 %316
        %318 = vrot.lane.b32.xlu0 %v281, 122
        %v319 = vpop.permute.xlu0 %318
        %vm320 = vcmp.lt.s32.totalorder %v289, 122
        %v321 = vsel %vm320, %v317, %v319
        %322 = vrot.lane.b32.xlu0 %v280, 121
        %v323 = vpop.permute.xlu0 %322
        %324 = vrot.lane.b32.xlu0 %v281, 121
        %v325 = vpop.permute.xlu0 %324
        %vm326 = vcmp.lt.s32.totalorder %v289, 121
        %v327 = vsel %vm326, %v323, %v325
        %328 = vrot.lane.b32.xlu0 %v280, 120
        %v329 = vpop.permute.xlu0 %328
        %330 = vrot.lane.b32.xlu0 %v281, 120
        %v331 = vpop.permute.xlu0 %330
        %vm332 = vcmp.lt.s32.totalorder %v289, 120
        %v333 = vsel %vm332, %v329, %v331
        %334 = vrot.lane.b32.xlu0 %v280, 119
        %v335 = vpop.permute.xlu0 %334
        %336 = vrot.lane.b32.xlu0 %v281, 119
        %v337 = vpop.permute.xlu0 %336
        %vm338 = vcmp.lt.s32.totalorder %v289, 119
        %v339 = vsel %vm338, %v335, %v337
        %340 = vrot.lane.b32.xlu0 %v280, 118
        %v341 = vpop.permute.xlu0 %340
        %342 = vrot.lane.b32.xlu0 %v281, 118
        %v343 = vpop.permute.xlu0 %342
        %vm344 = vcmp.lt.s32.totalorder %v289, 118
        %v345 = vsel %vm344, %v341, %v343
        %v347 = vrot.slane %v291, 4
        %v350 = vrot.slane %v303, 4
        %v353 = vrot.slane %v315, 4
        %v356 = vrot.slane %v327, 4
        %v359 = vrot.slane %v339, 4
        %vm361 = vcmask 1043456
        %v362 = vsel %vm361, %v280, %v347
        %v363 = vsel %vm361, %v297, %v350
        %v364 = vsel %vm361, %v309, %v353
        %v365 = vsel %vm361, %v321, %v356
        %v366 = vsel %vm361, %v333, %v359
        %vm367 = vcmask 359424
        %v369 = vsel %vm367, %v282, 0
        %v372 = vsel %vm367, %v283, 0
        %v375 = vsel %vm361, %v345, 0
        %377 = vmatprep.subr.mxu0 0.0
        %378 = vmatpush1.msra.mxu0 %v362
        %379 = vmatprep.subr.mxu0 0.0
        %380 = vmatpush1.msra.mxu0 %v363
        %381 = vmatprep.subr.mxu0 0.0
        %382 = vmatpush1.msra.mxu0 %v364
        %383 = vmatprep.subr.mxu0 0.0
        %384 = vmatpush1.msra.mxu0 %v365
        %385 = vmatprep.subr.mxu0 0.0
        %386 = vmatpush1.msra.mxu0 %v366
        %387 = vmatprep.subr.mxu0 0.0
        %388 = vmatpush1.msra.mxu0 %v375
        %389 = vmatprep.subr.mxu0 0.0
        %390 = vmatpush1.msra.mxu0 0.0
        %391 = vmatprep.subr.mxu0 0.0
        %392 = vmatpush1.msra.mxu0 0.0
        %393 = vmatprep.subr.mxu0 0.0
        %394 = vmatpush1.msra.mxu0 0.0
        %395 = vmatprep.subr.mxu0 0.0
        %396 = vmatpush1.msra.mxu0 0.0
        %397 = vmatprep.subr.mxu0 0.0
        %398 = vmatpush1.msra.mxu0 0.0
        %399 = vmatprep.subr.mxu0 0.0
        %400 = vmatpush1.msra.mxu0 0.0
        %401 = vmatprep.subr.mxu0 0.0
        %402 = vmatpush1.msra.mxu0 0.0
        %403 = vmatprep.subr.mxu0 0.0
        %404 = vmatpush1.msra.mxu0 0.0
        %405 = vmatprep.subr.mxu0 0.0
        %406 = vmatpush1.msra.mxu0 0.0
        %407 = vmatprep.subr.mxu0 0.0
        %408 = vmatpush1.msra.mxu0 0.0
        %409 = vmatprep.subr.mxu0 0.0
        %410 = vmatpush1.msra.mxu0 0.0
        %411 = vmatprep.subr.mxu0 0.0
        %412 = vmatpush1.msra.mxu0 0.0
        %413 = vmatprep.subr.mxu0 0.0
        %414 = vmatpush1.msra.mxu0 0.0
        %415 = vmatprep.subr.mxu0 0.0
        %416 = vmatpush1.msra.mxu0 0.0
        %417 = vmatprep.subr.mxu0 0.0
        %418 = vmatpush1.msra.mxu0 0.0
        %419 = vmatprep.subr.mxu0 0.0
        %420 = vmatpush1.msra.mxu0 0.0
        %421 = vmatprep.subr.mxu0 0.0
        %422 = vmatpush1.msra.mxu0 0.0
        %423 = vmatprep.subr.mxu0 0.0
        %424 = vmatpush1.msra.mxu0 0.0
        %425 = vmatprep.subr.mxu0 0.0
        %426 = vmatpush1.msra.mxu0 0.0
        %427 = vmatprep.subr.mxu0 0.0
        %428 = vmatpush1.msra.mxu0 0.0
        %429 = vmatprep.subr.mxu0 0.0
        %430 = vmatpush1.msra.mxu0 0.0
        %431 = vmatprep.subr.mxu0 0.0
        %432 = vmatpush1.msra.mxu0 0.0
        %433 = vmatprep.subr.mxu0 0.0
        %434 = vmatpush1.msra.mxu0 0.0
        %435 = vmatprep.subr.mxu0 0.0
        %436 = vmatpush1.msra.mxu0 0.0
        %437 = vmatprep.subr.mxu0 0.0
        %438 = vmatpush1.msra.mxu0 0.0
        %439 = vmatprep.subr.mxu0 0.0
        %440 = vmatpush1.msra.mxu0 0.0
        %441 = vmatprep.mubr.f32.mxu0 0.0
        %442 = vmatmul.mubr.f32.gmra.mrb[0].mxu0 %v369
        %v443 = vpop.f32.mrb[0].mxu0
        %v444 = vadd.f32 0.0, %v443
        %v445 = vpop.f32.mrb[0].mxu0
        %446 = vmatprep.mubr.f32.mxu0 0.0
        %447 = vmatmul.mubr.f32.gmra.mrb[0].mxu0 %v372
        %v448 = vpop.f32.mrb[0].mxu0
        %v449 = vadd.f32 0.0, %v448
        %v450 = vpop.f32.mrb[0].mxu0
        %451 = vdwg.mxu0
        %p452 = scmp.eq.s32.totalorder %s30, 0
        // Predicated region
        $region45: #{tpu_custom_call.1} parent=31 // pred_check
          %p453 = pneg %p452
        $region46: #{tpu_custom_call.1} parent=31 // pred_check_branch
          %455 = sbr.rel (%p453) target = $region48
        $region47: #{tpu_custom_call.1} parent=31 // pred_region
          %456 = vst [vmem:[%s274] sm:$0xff] 0.0
          %457 = vst [vmem:[%s274 + $0x8] sm:$0xff] 0.0
          %458 = vst [vmem:[%s274 + $0x10] sm:$0xff] 0.0
        $region48: #{tpu_custom_call.1} parent=31 // pred_fallthru
          _
        %s459 = sadd.s32 %s279, 128
        %p460 = scmp.le.s32.totalorder %s459, 16
        // Predicated region
        $region49: #{tpu_custom_call.1} parent=31 // pred_check
          %p461 = pneg %p460
        $region50: #{tpu_custom_call.1} parent=31 // pred_check_branch
          %463 = sbr.rel (%p461) target = $region52
        $region51: #{tpu_custom_call.1} parent=31 // pred_region
          %v464 = vld [vmem:[%s274] sm:$0xff]
          %v465 = vld [vmem:[%s274 + $0x8] sm:$0xff]
          %v466 = vld [vmem:[%s274 + $0x10] sm:$0xff]
          %v467 = vadd.f32 %v444, 0.0
          %v468 = vadd.f32 %v449, 0.0
          %v469 = vmul.f32 %v444, %v444
          %v470 = vmul.f32 %v449, %v449
          %v471 = vadd.f32 %v469, 0.0
          %v472 = vadd.f32 %v470, 0.0
          %v475 = vrot.slane %v471, 4
          %v476 = vrot.slane %v472, 4
          %v477 = vsel %vm361, %v475, %v476
          %v480 = vsel %vm361, %v468, %v475
          %v481 = vadd.f32 %v464, %v467
          %v482 = vadd.f32 %v465, %v480
          %v483 = vadd.f32 %v466, %v477
          %484 = vst [vmem:[%s274] sm:$0xff] %v481
          %485 = vst [vmem:[%s274 + $0x8] sm:$0xff] %v482
          %486 = vst [vmem:[%s274 + $0x10] sm:$0xff] %v483
        $region52: #{tpu_custom_call.1} parent=31 // pred_fallthru
          _
        %p487 = scmp.gt.s32.totalorder %s459, 16
        // Predicated region
        $region53: #{tpu_custom_call.1} parent=31 // pred_check
          %p488 = pneg %p487
        $region54: #{tpu_custom_call.1} parent=31 // pred_check_branch
          %490 = sbr.rel (%p488) target = $region56
        $region55: #{tpu_custom_call.1} parent=31 // pred_region
          %v491 = vstv %s279
          %v492 = vadd.s32 %v289, %v491
          %vm493 = vcmp.lt.s32.totalorder %v492, 16
          %v494 = vsel %vm493, %v444, 0.0
          %v495 = vsel %vm493, %v449, 0.0
          %v496 = vld [vmem:[%s274] sm:$0xff]
          %v497 = vld [vmem:[%s274 + $0x8] sm:$0xff]
          %v498 = vld [vmem:[%s274 + $0x10] sm:$0xff]
          %v499 = vadd.f32 %v494, 0.0
          %v500 = vadd.f32 %v495, 0.0
          %v501 = vmul.f32 %v494, %v494
          %v502 = vmul.f32 %v495, %v495
          %v503 = vadd.f32 %v501, 0.0
          %v504 = vadd.f32 %v502, 0.0
          %v507 = vrot.slane %v503, 4
          %v508 = vrot.slane %v504, 4
          %v509 = vsel %vm361, %v507, %v508
          %v512 = vsel %vm361, %v500, %v507
          %v513 = vadd.f32 %v496, %v499
          %v514 = vadd.f32 %v497, %v512
          %v515 = vadd.f32 %v498, %v509
          %516 = vst [vmem:[%s274] sm:$0xff] %v513
          %517 = vst [vmem:[%s274 + $0x8] sm:$0xff] %v514
          %518 = vst [vmem:[%s274 + $0x10] sm:$0xff] %v515
        $region56: #{tpu_custom_call.1} parent=31 // pred_fallthru
          _
        %s519 = sand.u32 %s135, 1
        %s520 = scalar_lea.sflag [#allocation4], %s519
        %s521 = sand.u32 %s135, 1
        %s522 = smul.addr %s521, 24
        %s523 = scalar_lea.vmem [#allocation8], %s522
        // Predicated region
        $region57: #{tpu_custom_call.1} parent=31 // pred_check
          %p524 = pneg %p145
        $region58: #{tpu_custom_call.1} parent=31 // pred_check_branch
          %526 = sbr.rel (%p524) target = $region60
        $region59: #{tpu_custom_call.1} parent=31 // pred_region
          %s528 = ssub.s32 384, 384
          %529 = vsyncadd %s520, %s528
          %s530 = smul.addr %s29, 3
          %s531 = smul.addr %s28, 3
          %s532 = sadd.s32 %s530, %s531
          %s533 = smul.addr %s532, 128
          %s534 = scalar_lea.hbm %s3, %s533
          %s535 = sshll.u32 %s523, 4
          %s536 = int_to_ptr.vmem [resolvable:$true] %s535
          %541 = dma.vmem_to_hbm [thread:$0]  %s536, 384, %s534, %s520, 128, 128, 8
        $region60: #{tpu_custom_call.1} parent=31 // pred_fallthru
          _
      $region32: #{tpu_custom_call.1} parent=5 // pred_fallthru
        _
      %p542 = scmp.le.s32.totalorder 2, %s18
      // Predicated region
      $region61: #{tpu_custom_call.1} parent=5 // pred_check
        %p543 = pneg %p542
      $region62: #{tpu_custom_call.1} parent=5 // pred_check_branch
        %545 = sbr.rel (%p543) target = $region64
      $region63: #{tpu_custom_call.1} parent=5 // pred_region
        %s546 = ssub.s32 %s18, 2
        // Predicated region
        $region65: #{tpu_custom_call.1} parent=63 // pred_check
          %p547 = pneg %p151
        $region66: #{tpu_custom_call.1} parent=63 // pred_check_branch
          %549 = sbr.rel (%p547) target = $region68
        $region67: #{tpu_custom_call.1} parent=63 // pred_region
          %s550 = sand.u32 %s136, 1
          %s551 = scalar_lea.sflag [#allocation4], %s550
          %s552 = sand.u32 %s136, 1
          %s553 = smul.addr %s552, 24
          %s554 = scalar_lea.vmem [#allocation8], %s553
          %555 = dma.done %s551, 384
        $region68: #{tpu_custom_call.1} parent=63 // pred_fallthru
          _
      $region64: #{tpu_custom_call.1} parent=5 // pred_fallthru
        _
    $region6: #{tpu_custom_call.1} parent=1 // loop_footer
      %s22 = sadd.s32 1, %s18
    $region7: #{tpu_custom_call.1} parent=1 // loop_footer_branch
      %17 = sbr.rel target = $region3
    $region8: #{tpu_custom_call.1} parent=1 // loop_exit
      _
    %556 = vsyncpa [#allocation3], 1
    %s557 = scalar_lea.sflag [#allocation3], 1
    %558 = vsyncpa %s557, 1
    %559 = vsyncpa [#allocation6], 1
    %s560 = scalar_lea.sflag [#allocation6], 1
    %561 = vsyncpa %s560, 1
    %562 = vsyncpa [#allocation4], 1
    %s563 = scalar_lea.sflag [#allocation4], 1
    %564 = vsyncpa %s563, 1

</llo_original>
